<compile_context>
chip_gen: v7x
topology: tpu7x:2x2x1
jax: 0.10.0
libtpu: 0.0.40
codegen_flags: <defaults>
</compile_context>

<pallas_src>
import jax
import jax.numpy as jnp
from jax.experimental import pallas as pl
from jax.experimental.pallas import tpu as pltpu


def lacu2_kernel(params_ref, x_ref, o_ref):
    # params_ref: SMEM (2,) float32 -> [alpha, beta]
    alpha = params_ref[0]
    beta = params_ref[1]

    x = x_ref[...].astype(jnp.float32)

    nonneg = x >= 0.0
    x_sq = x * x
    coef = jnp.where(nonneg, beta, alpha)      # beta on the positive branch, alpha on the negative
    t = coef * x_sq
    # Exact reciprocal (approx=True would violate the tight tolerance vs the torch reference).
    inv = pl.reciprocal(1.0 + t, approx=False)
    signed_t = jnp.where(nonneg, t, -t)

    o_ref[...] = (signed_t * inv).astype(o_ref.dtype)


def lacu2(x, alpha=1.0, beta=1.0, *, lane_width=512, tile_rows=1024):
    """Elementwise LACU2 over an arbitrary-shaped array. Returns same shape/dtype."""
    orig_shape = x.shape
    total = int(x.size)

    # Lane-dense flattening: (total,) -> (M, lane_width), padded at the tail.
    N = int(lane_width)
    M = pl.cdiv(total, N)
    padded = M * N

    xf = x.reshape(-1)
    if padded != total:
        xf = jnp.pad(xf, (0, padded - total))
    x2 = xf.reshape(M, N)

    # Tile rows: full axis for small inputs (always legal), otherwise a
    # sublane-aligned multiple-of-8 chunk (~2 MiB f32 tiles by default).
    if M <= tile_rows:
        tr = M
    else:
        tr = max(8, (tile_rows // 8) * 8)

    params = jnp.array([alpha, beta], dtype=jnp.float32)

    bytes_per_elem = jnp.dtype(x.dtype).itemsize
    cost = pl.CostEstimate(
        flops=5 * padded,                       # square, 2 selects, mul, mul-by-recip
        transcendentals=padded,                 # one reciprocal per element
        bytes_accessed=2 * padded * bytes_per_elem,
    )

    out2 = pl.pallas_call(
        lacu2_kernel,
        out_shape=jax.ShapeDtypeStruct((M, N), x.dtype),
        grid=(pl.cdiv(M, tr),),
        in_specs=[
            pl.BlockSpec(memory_space=pltpu.SMEM),       # [alpha, beta] scalars
            pl.BlockSpec((tr, N), lambda i: (i, 0)),     # lane-dense x tile
        ],
        out_specs=pl.BlockSpec((tr, N), lambda i: (i, 0)),
        compiler_params=pltpu.CompilerParams(
            dimension_semantics=("parallel",)),
        cost_estimate=cost,
    )(params, x2)

    # Strip the padded tail before restoring the original NCHW shape.
    return out2.reshape(-1)[:total].reshape(orig_shape)


def lacu2_ref(x, alpha=1.0, beta=1.0):
    xf = x.astype(jnp.float32)
    relu_x = jnp.maximum(xf, 0.0)
    relu_neg_x = jnp.maximum(-xf, 0.0)
    pos_part = 1.0 / (1.0 + alpha * relu_neg_x ** 2)
    neg_part = 1.0 / (1.0 + beta * relu_x ** 2)
    return (pos_part - neg_part).astype(x.dtype)


if __name__ == "__main__":
    key = jax.random.PRNGKey(0)

    # Module defaults: alpha=1.0, beta=1.0.
    alpha = 1.0
    beta = 1.0

    # Small NCHW input.
    x = jax.random.normal(key, (2, 4, 16, 16), dtype=jnp.float32)

    out = lacu2(x, alpha, beta)
    out = jax.block_until_ready(out)

    ref = lacu2_ref(x, alpha, beta)
    assert out.shape == x.shape and out.dtype == x.dtype
    # The algebraically simplified form (t/(1+t) vs 1 - 1/(1+t)) differs by a
    # couple of f32 ULPs from the naive reference; values are bounded in (-1,1).
    assert jnp.allclose(out, ref, atol=1e-5, rtol=1e-5), "mismatch vs reference"

    print("KERNEL_OK")
</pallas_src>

<mosaic_0001>
module attributes {stable_mosaic.version = 11 : i64} {
  func.func @lacu2_kernel(%arg0: i32, %arg1: memref<2xf32, #tpu.memory_space<smem>>, %arg2: memref<4x512xf32, #tpu.memory_space<vmem>>, %arg3: memref<4x512xf32, #tpu.memory_space<vmem>>) attributes {dimension_semantics = [#tpu.dimension_semantics<parallel>], iteration_bounds = array<i64: 1>, scalar_prefetch = 0 : i64, scratch_operands = 0 : i64, tpu.core_type = #tpu.core_type<tc>, window_params = [{transform_indices = @transform_0, window_bounds = array<i64: 2>}, {transform_indices = @transform_1, window_bounds = array<i64: 4, 512>}, {transform_indices = @transform_2, window_bounds = array<i64: 4, 512>}]} {
    %c0 = arith.constant 0 : index
    %0 = memref.load %arg1[%c0] : memref<2xf32, #tpu.memory_space<smem>>
    %c1 = arith.constant 1 : index
    %1 = memref.load %arg1[%c1] : memref<2xf32, #tpu.memory_space<smem>>
    %c0_0 = arith.constant 0 : index
    %c0_1 = arith.constant 0 : index
    %2 = vector.load %arg2[%c0_0, %c0_1] : memref<4x512xf32, #tpu.memory_space<vmem>>, vector<4x512xf32>
    %cst = arith.constant 0.000000e+00 : f32
    %3 = vector.broadcast %cst : f32 to vector<4x512xf32>
    %4 = arith.cmpf oge, %2, %3 : vector<4x512xf32>
    %5 = arith.mulf %2, %2 : vector<4x512xf32>
    %6 = vector.broadcast %1 : f32 to vector<4x512xf32>
    %7 = vector.broadcast %0 : f32 to vector<4x512xf32>
    %8 = arith.select %4, %6, %7 : vector<4x512xi1>, vector<4x512xf32>
    %9 = arith.mulf %8, %5 : vector<4x512xf32>
    %cst_2 = arith.constant 1.000000e+00 : f32
    %10 = vector.broadcast %cst_2 : f32 to vector<4x512xf32>
    %11 = arith.addf %10, %9 : vector<4x512xf32>
    %12 = tpu.reciprocal %11 : vector<4x512xf32> -> vector<4x512xf32>
    %cst_3 = arith.constant 0.000000e+00 : f32
    %13 = vector.broadcast %cst_3 : f32 to vector<4x512xf32>
    %14 = arith.subf %13, %9 : vector<4x512xf32>
    %15 = arith.select %4, %9, %14 : vector<4x512xi1>, vector<4x512xf32>
    %16 = arith.mulf %15, %12 : vector<4x512xf32>
    %c0_4 = arith.constant 0 : index
    %c0_5 = arith.constant 0 : index
    %17 = vector.load %arg3[%c0_4, %c0_5] : memref<4x512xf32, #tpu.memory_space<vmem>>, vector<4x512xf32>
    tpu.vector_store %arg3[%c0_4, %c0_5], %16 {strides = array<i32>} : memref<4x512xf32, #tpu.memory_space<vmem>>, vector<4x512xf32>,
    return
  }
  func.func @transform_0(%arg0: i32) -> i32 {
    %c0_i32 = arith.constant 0 : i32
    %c0_i32_0 = arith.constant 0 : i32
    return %c0_i32 : i32
  }
  func.func @transform_1(%arg0: i32) -> (i32, i32) {
    %c0_i32 = arith.constant 0 : i32
    %c0_i32_0 = arith.constant 0 : i32
    return %arg0, %c0_i32 : i32, i32
  }
  func.func @transform_2(%arg0: i32) -> (i32, i32) {
    %c0_i32 = arith.constant 0 : i32
    %c0_i32_0 = arith.constant 0 : i32
    return %arg0, %c0_i32 : i32, i32
  }
}

</mosaic_0001>

<llo_original>
// kernel: tpu_custom_call.1
$region0: #{tpu_custom_call.1}
  #allocation0 [shape = 'u32[]', space=smem, size = 0x4, offset = 0x4, fixed_abs, tag = 'smem constant byte address 0x4 - core index']
  #allocation1 [shape = 'u32[144,128]{1,0:T(1,128)}', space=vmem, size = 0x12000, scoped, tag = 'internal scratch']
  %s0 = inlined_call_operand.hbm [shape: f32[2], index: 0, kind: input, shape index: {}]
  %s1 = inlined_call_operand.hbm [shape: f32[4,512], index: 1, kind: input, shape index: {}]
  %s2 = inlined_call_operand.hbm [shape: f32[4,512], index: 2, kind: output, shape index: {}]
  %s3 = sld [smem:[#allocation0]]
  $region26: #{tpu_custom_call.1} parent=0
    _
  %s5 = ssub.s32 1, %s3
  %s6 = scalar_select 0, %s5, %s3
  $region1: #{tpu_custom_call.1} parent=0
    #allocation2 [shape = 'u8[512]{0}', space=smem, size = 0x200, scoped, tag = 'input window, operand 0, single buffered']
    #allocation3 [shape = 's32[1]{0}', space=sflag, size = 0x4, scoped, tag = 'scoped memory for tpu_custom_call.1']
    #allocation4 [shape = 's32[1]{0}', space=sflag, size = 0x4, scoped, tag = 'scoped memory for tpu_custom_call.1']
    #allocation5 [shape = 's32[1]{0}', space=sflag, size = 0x4, scoped, tag = 'scoped memory for tpu_custom_call.1']
    #allocation6 [shape = 'u8[8192]{0}', space=vmem, size = 0x2000, scoped, tag = 'input window, operand 1, single buffered']
    #allocation7 [shape = 'u8[8192]{0}', space=vmem, size = 0x2000, scoped, tag = 'output window, operand 0, single buffered']
    %7 = vsyncpa [#allocation5], 0
    %8 = vsyncpa [#allocation3], 0
    %9 = vsyncpa [#allocation4], 0
    // Predicated region
    $region2: #{tpu_custom_call.1} parent=1 // pred_check
      _
    $region3: #{tpu_custom_call.1} parent=1 // pred_check_branch
      %11 = sbr.rel (0) target = $region5
    $region4: #{tpu_custom_call.1} parent=1 // pred_region
      %s13 = ssub.s32 16, 16
      %14 = vsyncadd [#allocation5], %s13
      %17 = dma.hbm_to_smem %s0, 16, [#allocation2], [#allocation5]
    $region5: #{tpu_custom_call.1} parent=1 // pred_fallthru
      _
    // Predicated region
    $region6: #{tpu_custom_call.1} parent=1 // pred_check
      _
    $region7: #{tpu_custom_call.1} parent=1 // pred_check_branch
      %19 = sbr.rel (0) target = $region9
    $region8: #{tpu_custom_call.1} parent=1 // pred_region
      %s21 = ssub.s32 256, 256
      %22 = vsyncadd [#allocation3], %s21
      %s24 = sshll.u32 [#allocation6], 4
      %s25 = int_to_ptr.vmem [resolvable:$true] %s24
      %27 = dma.hbm_to_vmem [thread:$0]  %s1, 256, %s25, [#allocation3]
    $region9: #{tpu_custom_call.1} parent=1 // pred_fallthru
      _
    // Predicated region
    $region10: #{tpu_custom_call.1} parent=1 // pred_check
      _
    $region11: #{tpu_custom_call.1} parent=1 // pred_check_branch
      %29 = sbr.rel (0) target = $region13
    $region12: #{tpu_custom_call.1} parent=1 // pred_region
      %30 = dma.done [#allocation5], 16
    $region13: #{tpu_custom_call.1} parent=1 // pred_fallthru
      _
    // Predicated region
    $region14: #{tpu_custom_call.1} parent=1 // pred_check
      _
    $region15: #{tpu_custom_call.1} parent=1 // pred_check_branch
      %32 = sbr.rel (0) target = $region17
    $region16: #{tpu_custom_call.1} parent=1 // pred_region
      %33 = dma.done [#allocation3], 256
    $region17: #{tpu_custom_call.1} parent=1 // pred_fallthru
      _
    %34 = sfence
    %s35 = sld [smem:[#allocation2]]
    %s36 = sld [smem:[#allocation2 + $0x1]]
    %v37 = vld [vmem:[#allocation6] sm:$0xff]
    %v38 = vld [vmem:[#allocation6 + $0x8] sm:$0xff]
    %vm39 = vcmp.ge.f32.partialorder %v37, 0.0
    %vm40 = vcmp.ge.f32.partialorder %v38, 0.0
    %v41 = vmul.f32 %v37, %v37
    %v42 = vmul.f32 %v38, %v38
    %v43 = vstv %s36
    %v44 = vstv %s35
    %v45 = vsel %vm39, %v43, %v44
    %v46 = vsel %vm40, %v43, %v44
    %v47 = vmul.f32 %v45, %v41
    %v48 = vmul.f32 %v46, %v42
    %v49 = vadd.f32 %v47, 1.0
    %v50 = vadd.f32 %v48, 1.0
    %v51 = vrcp.pop %v49
    %v52 = vrcp.pop %v50
    %v53 = vsub.f32 0.0, %v47
    %v54 = vsub.f32 0.0, %v48
    %v55 = vsel %vm39, %v47, %v53
    %v56 = vsel %vm40, %v48, %v54
    %v57 = vmul.f32 %v55, %v51
    %v58 = vmul.f32 %v56, %v52
    %59 = vst [vmem:[#allocation7] sm:$0xff] %v57
    %60 = vst [vmem:[#allocation7 + $0x8] sm:$0xff] %v58
    // Predicated region
    $region18: #{tpu_custom_call.1} parent=1 // pred_check
      _
    $region19: #{tpu_custom_call.1} parent=1 // pred_check_branch
      %62 = sbr.rel (0) target = $region21
    $region20: #{tpu_custom_call.1} parent=1 // pred_region
      %s64 = ssub.s32 256, 256
      %65 = vsyncadd [#allocation4], %s64
      %s67 = sshll.u32 [#allocation7], 4
      %s68 = int_to_ptr.vmem [resolvable:$true] %s67
      %70 = dma.vmem_to_hbm [thread:$0]  %s68, 256, %s2, [#allocation4]
    $region21: #{tpu_custom_call.1} parent=1 // pred_fallthru
      _
    // Predicated region
    $region22: #{tpu_custom_call.1} parent=1 // pred_check
      _
    $region23: #{tpu_custom_call.1} parent=1 // pred_check_branch
      %72 = sbr.rel (0) target = $region25
    $region24: #{tpu_custom_call.1} parent=1 // pred_region
      %73 = dma.done [#allocation4], 256
    $region25: #{tpu_custom_call.1} parent=1 // pred_fallthru
      _
    %74 = vsyncpa [#allocation3], 1
    %75 = vsyncpa [#allocation4], 1
    %76 = vsyncpa [#allocation5], 1

</llo_original>
